<compile_context>
chip_gen: v5e
topology: v5e:2x2
jax: 0.10.0
libtpu: 0.0.40
codegen_flags: <defaults>
</compile_context>

<pallas_src>
import functools

import jax
import jax.numpy as jnp
from jax import lax
from jax.experimental import pallas as pl
from jax.experimental.pallas import tpu as pltpu


def _dense_tanh(x, w_ref, b_ref, out_dtype):
    # PyTorch Linear: y = x @ W.T + b.  Express the contraction directly
    # (x dim 1 = H_in against w dim 1 = H_in) so W.T is never materialized.
    y = lax.dot_general(
        x,
        w_ref[...],
        dimension_numbers=(((1,), (1,)), ((), ())),
        preferred_element_type=jnp.float32,
    )
    y = y + b_ref[...]                       # [1, H_out] broadcasts over batch tile
    return jnp.tanh(y).astype(out_dtype)


def _cls_kernel(hs_ref, w_ref, b_ref, o_ref):
    # hs_ref: [tB, tS_cls, H] (only the first few seq rows were fetched)
    # w_ref : [H_out, H_in]   b_ref: [1, H_out]   o_ref: [tB, H_out]
    x = hs_ref[:, 0, :].astype(jnp.float32)  # CLS token, [tB, H]
    o_ref[...] = _dense_tanh(x, w_ref, b_ref, o_ref.dtype)


def _mean_kernel(hs_ref, w_ref, b_ref, o_ref, acc_ref, *, inv_s):
    # hs_ref: [tB, tS, H] seq tile; acc_ref: [tB, H] f32 running sum.
    s = pl.program_id(1)

    @pl.when(s == 0)
    def _():
        acc_ref[...] = jnp.zeros_like(acc_ref)

    acc_ref[...] += jnp.sum(hs_ref[...].astype(jnp.float32), axis=1)

    @pl.when(s == pl.num_programs(1) - 1)
    def _():
        x = acc_ref[...] * inv_s             # mean = running_sum * (1/S)
        o_ref[...] = _dense_tanh(x, w_ref, b_ref, o_ref.dtype)


def _pick_tile(dim, target):
    """Largest t <= target that divides dim and is sublane-friendly (t % 8 == 0),
    falling back to the full dim (full-extent blocks are always legal)."""
    if dim <= target:
        return dim
    for t in range(target, 0, -1):
        if dim % t == 0 and t % 8 == 0:
            return t
    return dim


def bert_pooler(hidden_states, weight, bias, *, mode="cls",
                batch_tile=128, seq_tile=256):
    """hidden_states: [B, S, H]; weight: [H_out, H_in] (PyTorch layout); bias: [H]."""
    B, S, H = hidden_states.shape
    bias2d = bias.reshape(1, H)
    tB = _pick_tile(B, batch_tile)           # MXU-friendly M tile, 128 cap
    nb = B // tB

    if mode == "cls":
        # Fetch only the first sublane tile of the sequence axis: the CLS row
        # lives there and DMA granularity is 8 sublanes anyway, so this costs
        # the same as one row while the remaining S - tS rows stay in HBM.
        tS = min(S, 8)
        return pl.pallas_call(
            _cls_kernel,
            out_shape=jax.ShapeDtypeStruct((B, H), hidden_states.dtype),
            grid_spec=pltpu.PrefetchScalarGridSpec(
                num_scalar_prefetch=0,
                grid=(nb,),
                in_specs=[
                    pl.BlockSpec((tB, tS, H), lambda i: (i, 0, 0)),
                    pl.BlockSpec((H, H), lambda i: (0, 0)),   # weight resident
                    pl.BlockSpec((1, H), lambda i: (0, 0)),   # bias resident
                ],
                out_specs=pl.BlockSpec((tB, H), lambda i: (i, 0)),
            ),
            compiler_params=pltpu.CompilerParams(
                dimension_semantics=("parallel",)),
        )(hidden_states, weight, bias2d)

    if mode == "mean":
        tS = _pick_tile(S, seq_tile)
        ns = S // tS
        kernel = functools.partial(_mean_kernel, inv_s=float(1.0 / S))
        return pl.pallas_call(
            kernel,
            out_shape=jax.ShapeDtypeStruct((B, H), hidden_states.dtype),
            grid_spec=pltpu.PrefetchScalarGridSpec(
                num_scalar_prefetch=0,
                grid=(nb, ns),                               # reduction axis last
                in_specs=[
                    pl.BlockSpec((tB, tS, H), lambda i, s: (i, s, 0)),
                    pl.BlockSpec((H, H), lambda i, s: (0, 0)),  # weight resident
                    pl.BlockSpec((1, H), lambda i, s: (0, 0)),  # bias resident
                ],
                out_specs=pl.BlockSpec((tB, H), lambda i, s: (i, 0)),
                scratch_shapes=[pltpu.VMEM((tB, H), jnp.float32)],
            ),
            compiler_params=pltpu.CompilerParams(
                dimension_semantics=("parallel", "arbitrary")),
        )(hidden_states, weight, bias2d)

    raise NotImplementedError(mode)


def _reference(hidden_states, weight, bias, mode="cls"):
    if mode == "cls":
        x = hidden_states[:, 0]
    else:
        x = hidden_states.mean(axis=1)
    return jnp.tanh(x @ weight.T + bias)


if __name__ == "__main__":
    B, S, H = 2, 8, 32
    key = jax.random.PRNGKey(0)
    k_hs, k_w, k_b = jax.random.split(key, 3)

    hidden_states = jax.random.normal(k_hs, (B, S, H), dtype=jnp.float32)
    # Deterministic synthetic Linear(H, H) parameters (PyTorch [out, in] layout).
    weight = jax.random.normal(k_w, (H, H), dtype=jnp.float32) * (1.0 / jnp.sqrt(H))
    bias = jax.random.normal(k_b, (H,), dtype=jnp.float32) * 0.01

    out_cls = jax.block_until_ready(bert_pooler(hidden_states, weight, bias, mode="cls"))
    out_mean = jax.block_until_ready(bert_pooler(hidden_states, weight, bias, mode="mean"))

    ref_cls = _reference(hidden_states, weight, bias, mode="cls")
    ref_mean = _reference(hidden_states, weight, bias, mode="mean")

    assert out_cls.shape == (B, H)
    assert out_mean.shape == (B, H)
    assert jnp.allclose(out_cls, ref_cls, atol=1e-5, rtol=1e-5)
    assert jnp.allclose(out_mean, ref_mean, atol=1e-5, rtol=1e-5)

    print("KERNEL_OK")
</pallas_src>

<mosaic_0001>
module attributes {stable_mosaic.version = 11 : i64} {
  func.func @_cls_kernel(%arg0: i32, %arg1: memref<2x8x32xf32, #tpu.memory_space<vmem>>, %arg2: memref<32x32xf32, #tpu.memory_space<vmem>>, %arg3: memref<1x32xf32, #tpu.memory_space<vmem>>, %arg4: memref<2x32xf32, #tpu.memory_space<vmem>>) attributes {dimension_semantics = [#tpu.dimension_semantics<parallel>], iteration_bounds = array<i64: 1>, scalar_prefetch = 0 : i64, scratch_operands = 0 : i64, tpu.core_type = #tpu.core_type<tc>, window_params = [{transform_indices = @transform_0, window_bounds = array<i64: 2, 8, 32>}, {pipeline_mode = #tpu.pipeline_mode<synchronous>, transform_indices = @transform_1, window_bounds = array<i64: 32, 32>}, {pipeline_mode = #tpu.pipeline_mode<synchronous>, transform_indices = @transform_2, window_bounds = array<i64: 1, 32>}, {transform_indices = @transform_3, window_bounds = array<i64: 2, 32>}]} {
    %c0 = arith.constant 0 : index
    %c0_0 = arith.constant 0 : index
    %c0_1 = arith.constant 0 : index
    %0 = vector.load %arg1[%c0, %c0_0, %c0_1] : memref<2x8x32xf32, #tpu.memory_space<vmem>>, vector<2x1x32xf32>
    %1 = vector.shape_cast %0 : vector<2x1x32xf32> to vector<2x32xf32>
    %c0_2 = arith.constant 0 : index
    %c0_3 = arith.constant 0 : index
    %2 = vector.load %arg2[%c0_2, %c0_3] : memref<32x32xf32, #tpu.memory_space<vmem>>, vector<32x32xf32>
    %cst = arith.constant dense<0.000000e+00> : vector<2x32xf32>
    %3 = tpu.matmul %1, %2, %cst {dimension_numbers = #tpu.dot_dimension_numbers<[1], [1], [0], [0], [0, 0, 1, 0], [], []>} : vector<2x32xf32>, vector<32x32xf32>, vector<2x32xf32> -> vector<2x32xf32>
    %c0_4 = arith.constant 0 : index
    %c0_5 = arith.constant 0 : index
    %4 = vector.load %arg3[%c0_4, %c0_5] : memref<1x32xf32, #tpu.memory_space<vmem>>, vector<1x32xf32>
    %5 = vector.broadcast %4 : vector<1x32xf32> to vector<2x32xf32>
    %6 = arith.addf %3, %5 : vector<2x32xf32>
    %7 = math.tanh %6 : vector<2x32xf32>
    %c0_6 = arith.constant 0 : index
    %c0_7 = arith.constant 0 : index
    %8 = vector.load %arg4[%c0_6, %c0_7] : memref<2x32xf32, #tpu.memory_space<vmem>>, vector<2x32xf32>
    tpu.vector_store %arg4[%c0_6, %c0_7], %7 {strides = array<i32>} : memref<2x32xf32, #tpu.memory_space<vmem>>, vector<2x32xf32>,
    return
  }
  func.func @transform_0(%arg0: i32) -> (i32, i32, i32) {
    %c0_i32 = arith.constant 0 : i32
    %c0_i32_0 = arith.constant 0 : i32
    %c0_i32_1 = arith.constant 0 : i32
    return %arg0, %c0_i32, %c0_i32_0 : i32, i32, i32
  }
  func.func @transform_1(%arg0: i32) -> (i32, i32) {
    %c0_i32 = arith.constant 0 : i32
    %c0_i32_0 = arith.constant 0 : i32
    %c0_i32_1 = arith.constant 0 : i32
    return %c0_i32, %c0_i32_0 : i32, i32
  }
  func.func @transform_2(%arg0: i32) -> (i32, i32) {
    %c0_i32 = arith.constant 0 : i32
    %c0_i32_0 = arith.constant 0 : i32
    %c0_i32_1 = arith.constant 0 : i32
    return %c0_i32, %c0_i32_0 : i32, i32
  }
  func.func @transform_3(%arg0: i32) -> (i32, i32) {
    %c0_i32 = arith.constant 0 : i32
    %c0_i32_0 = arith.constant 0 : i32
    return %arg0, %c0_i32 : i32, i32
  }
}

</mosaic_0001>

<llo_original>
// kernel: tpu_custom_call.1
$region0: #{tpu_custom_call.1}
  #allocation0 [shape = 'u32[]', space=smem, size = 0x4, offset = 0x4, fixed_abs, tag = 'smem constant byte address 0x4 - core index']
  #allocation1 [shape = 'u32[72,128]{1,0:T(1,128)}', space=vmem, size = 0x9000, scoped, tag = 'internal scratch']
  %s0 = inlined_call_operand.hbm [shape: f32[2,8,32], index: 0, kind: input, shape index: {}]
  %s1 = inlined_call_operand.hbm [shape: f32[32,32], index: 1, kind: input, shape index: {}]
  %s2 = inlined_call_operand.vmem [shape: f32[1,32], index: 2, kind: input, shape index: {}]
  %s3 = inlined_call_operand.hbm [shape: f32[2,32], index: 3, kind: output, shape index: {}]
  %s4 = sld [smem:[#allocation0]]
  $region30: #{tpu_custom_call.1} parent=0
    _
  %s6 = ssub.s32 1, %s4
  %s7 = scalar_select 0, %s6, %s4
  $region1: #{tpu_custom_call.1} parent=0
    #allocation2 [shape = 'u8[8192]{0}', space=vmem, size = 0x2000, scoped, tag = 'input window, operand 0, single buffered']
    #allocation3 [shape = 's32[1]{0}', space=sflag, size = 0x4, scoped, tag = 'scoped memory for tpu_custom_call.1']
    #allocation4 [shape = 's32[1]{0}', space=sflag, size = 0x4, scoped, tag = 'scoped memory for tpu_custom_call.1']
    #allocation5 [shape = 'u8[16384]{0}', space=vmem, size = 0x4000, scoped, tag = 'input window, operand 1, single buffered']
    #allocation6 [shape = 's32[1]{0}', space=sflag, size = 0x4, scoped, tag = 'scoped memory for tpu_custom_call.1']
    #allocation7 [shape = 'u8[1024]{0}', space=vmem, size = 0x400, scoped, tag = 'output window, operand 0, single buffered']
    %8 = vsyncpa [#allocation3], 0
    %9 = vsyncpa [#allocation6], 0
    %10 = vsyncpa [#allocation4], 0
    // Predicated region
    $region2: #{tpu_custom_call.1} parent=1 // pred_check
      _
    $region3: #{tpu_custom_call.1} parent=1 // pred_check_branch
      %12 = sbr.rel (0) target = $region5
    $region4: #{tpu_custom_call.1} parent=1 // pred_region
      %14 = vsyncadd [#allocation3], 0
      %s15 = sshll.u32 %s0, 4
      %s16 = int_to_ptr.hbm [resolvable:$true] %s15
      %s17 = sshll.u32 [#allocation2], 4
      %s18 = int_to_ptr.vmem [resolvable:$true] %s17
      %23 = dma.hbm_to_vmem [thread:$0]  %s16, 256, %s18, [#allocation3], 128, 128, 8
    $region5: #{tpu_custom_call.1} parent=1 // pred_fallthru
      _
    // Predicated region
    $region6: #{tpu_custom_call.1} parent=1 // pred_check
      _
    $region7: #{tpu_custom_call.1} parent=1 // pred_check_branch
      %25 = sbr.rel (0) target = $region9
    $region8: #{tpu_custom_call.1} parent=1 // pred_region
      %27 = vsyncadd [#allocation6], 0
      %s28 = sshll.u32 %s1, 4
      %s29 = int_to_ptr.hbm [resolvable:$true] %s28
      %s30 = sshll.u32 [#allocation5], 4
      %s31 = int_to_ptr.vmem [resolvable:$true] %s30
      %36 = dma.hbm_to_vmem [thread:$0]  %s29, 512, %s31, [#allocation6], 128, 128, 8
    $region9: #{tpu_custom_call.1} parent=1 // pred_fallthru
      _
    // Predicated region
    $region10: #{tpu_custom_call.1} parent=1 // pred_check
      _
    $region11: #{tpu_custom_call.1} parent=1 // pred_check_branch
      %38 = sbr.rel (0) target = $region13
    $region12: #{tpu_custom_call.1} parent=1 // pred_region
      _
    $region13: #{tpu_custom_call.1} parent=1 // pred_fallthru
      _
    // Predicated region
    $region14: #{tpu_custom_call.1} parent=1 // pred_check
      _
    $region15: #{tpu_custom_call.1} parent=1 // pred_check_branch
      %40 = sbr.rel (0) target = $region17
    $region16: #{tpu_custom_call.1} parent=1 // pred_region
      %42 = dma.done [#allocation3], 256
    $region17: #{tpu_custom_call.1} parent=1 // pred_fallthru
      _
    // Predicated region
    $region18: #{tpu_custom_call.1} parent=1 // pred_check
      _
    $region19: #{tpu_custom_call.1} parent=1 // pred_check_branch
      %44 = sbr.rel (0) target = $region21
    $region20: #{tpu_custom_call.1} parent=1 // pred_region
      %46 = dma.done [#allocation6], 512
    $region21: #{tpu_custom_call.1} parent=1 // pred_fallthru
      _
    %v47 = vld [vmem:[#allocation2] sm:$0x1]
    %v48 = vld [vmem:[#allocation2 + $0x8] sm:$0x1]
    %v49 = vld [vmem:[#allocation5] sm:$0xff]
    %v50 = vld [vmem:[#allocation5 + $0x8] sm:$0xff]
    %v51 = vld [vmem:[#allocation5 + $0x10] sm:$0xff]
    %v52 = vld [vmem:[#allocation5 + $0x18] sm:$0xff]
    %v53 = vld [vmem:[%s2] sm:$0x1]
    %v55 = vperm.slane %v53, 0
    %v59 = vrot.slane %v48, 7
    %vm60 = vcmask 1041409
    %v61 = vsel %vm60, %v59, %v47
    %vm62 = vcmask 261120
    %v63 = vsel %vm62, %v61, 0
    %v66 = vsel %vm62, %v49, 0
    %v69 = vsel %vm62, %v50, 0
    %v72 = vsel %vm62, %v51, 0
    %v75 = vsel %vm62, %v52, 0
    %77 = vmatpush.xpose.msra.mxu0 0.0
    %78 = vmatpush.xpose.msra.mxu0 0.0
    %79 = vmatpush.xpose.msra.mxu0 0.0
    %80 = vmatpush.xpose.msra.mxu0 0.0
    %81 = vmatpush.xpose.msra.mxu0 0.0
    %82 = vmatpush.xpose.msra.mxu0 0.0
    %83 = vmatpush.xpose.msra.mxu0 0.0
    %84 = vmatpush.xpose.msra.mxu0 0.0
    %85 = vmatpush.xpose.msra.mxu0 0.0
    %86 = vmatpush.xpose.msra.mxu0 0.0
    %87 = vmatpush.xpose.msra.mxu0 0.0
    %88 = vmatpush.xpose.msra.mxu0 0.0
    %89 = vmatpush.xpose.msra.mxu0 %v75
    %90 = vmatpush.xpose.msra.mxu0 %v72
    %91 = vmatpush.xpose.msra.mxu0 %v69
    %92 = vmatpush.xpose.msra.mxu0 %v66
    %93 = vmatmul.f32.gmra.mxu0 %v63
    %v94 = vpop.f32.mrf.mxu0
    %v95 = vadd.f32 %v55, %v94
    %96 = vdwg.mxu0
    %v97 = vtanh.pop %v95
    %vm98 = vcmask 254976
    %99 = vst.msk [vmem:[#allocation7] sm:$0x3] %vm98, %v97
    // Predicated region
    $region22: #{tpu_custom_call.1} parent=1 // pred_check
      _
    $region23: #{tpu_custom_call.1} parent=1 // pred_check_branch
      %101 = sbr.rel (0) target = $region25
    $region24: #{tpu_custom_call.1} parent=1 // pred_region
      %103 = vsyncadd [#allocation4], 0
      %s105 = sshll.u32 [#allocation7], 4
      %s106 = int_to_ptr.vmem [resolvable:$true] %s105
      %s107 = sshll.u32 %s3, 4
      %s108 = int_to_ptr.hbm [resolvable:$true] %s107
      %110 = dma.vmem_to_hbm [thread:$0]  %s106, 32, %s108, [#allocation4]
    $region25: #{tpu_custom_call.1} parent=1 // pred_fallthru
      _
    // Predicated region
    $region26: #{tpu_custom_call.1} parent=1 // pred_check
      _
    $region27: #{tpu_custom_call.1} parent=1 // pred_check_branch
      %112 = sbr.rel (0) target = $region29
    $region28: #{tpu_custom_call.1} parent=1 // pred_region
      %114 = dma.done [#allocation4], 32
    $region29: #{tpu_custom_call.1} parent=1 // pred_fallthru
      _
    %115 = vsyncpa [#allocation3], 1
    %116 = vsyncpa [#allocation6], 1
    %117 = vsyncpa [#allocation4], 1

</llo_original>
